<compile_context>
chip_gen: v5e
topology: v5e:2x2
jax: 0.10.0
libtpu: 0.0.40
codegen_flags: <defaults>
</compile_context>

<pallas_src>
import jax
import jax.numpy as jnp
from jax.experimental import pallas as pl
from jax.experimental.pallas import tpu as pltpu

_LANE = 128


# -----------------------------------------------------------------------------
# Kernel
# -----------------------------------------------------------------------------
def _merge_kernel(x_ref, o_ref):
    """Merge the C delta channels into the lane dimension.

    x_ref: (1, C, tT, D)   one batch / time-tile of the input
    o_ref: (1, tT, C*D)    the matching lane-dense output block

    C static per-channel copies (stores at lane offset c*D); when D is a
    multiple of 128 every store is a full-width unmasked vst.
    """
    C = x_ref.shape[1]
    D = x_ref.shape[3]
    for c in range(C):  # C is small & static -> fully unrolled
        o_ref[0, :, c * D:(c + 1) * D] = x_ref[0, c, :, :]


# -----------------------------------------------------------------------------
# Wrapper helpers
# -----------------------------------------------------------------------------
def _vmem_capacity_bytes():
    """Per-core VMEM capacity; conservative fallback if the query fails."""
    try:
        return int(pltpu.get_tpu_info().vmem_capacity_bytes)
    except Exception:
        return 64 * 1024 * 1024  # v7x per-TC VMEM (smallest of current gens)


def _sublane_multiple(itemsize):
    """Dtype-native sublane packing: 8 for f32, 16 for bf16, 32 for int8/fp8."""
    return max(8, 32 // max(int(itemsize), 1))


def _choose_t_tile(T, per_row_bytes, sub, budget_bytes):
    """Largest sublane-multiple time tile whose (padded, double-buffered)
    in+out blocks fit within budget_bytes."""
    t_tile = (budget_bytes // max(per_row_bytes, 1)) // sub * sub
    t_tile = max(sub, t_tile)
    if t_tile >= T:
        return T  # full extent is always a legal block size
    return t_tile


# -----------------------------------------------------------------------------
# Wrapper
# -----------------------------------------------------------------------------
def unstack_delta(x: jnp.ndarray, *, t_tile=None) -> jnp.ndarray:
    """Pallas implementation of UnStackDelta.forward: (N, C, T, D) -> (N, T, C*D)."""
    assert x.ndim == 4, "UnStackDelta expects a 4-D input"
    N, C, T, D = x.shape
    itemsize = x.dtype.itemsize
    sub = _sublane_multiple(itemsize)

    out_shape = jax.ShapeDtypeStruct((N, T, C * D), x.dtype)

    # Zero-FLOP, pure HBM traffic: read + write every element once.
    cost = pl.CostEstimate(flops=0, transcendentals=0,
                           bytes_accessed=2 * N * C * T * D * itemsize)

    # --- padding-aware VMEM accounting -------------------------------------
    # Input block rows are physically laid out at ceil(D/128)*128 lanes per
    # channel; the output block at ceil(C*D/128)*128 lanes. Both blocks are
    # double-buffered by the pipeline.
    d_pad = pl.cdiv(D, _LANE) * _LANE
    cd_pad = pl.cdiv(C * D, _LANE) * _LANE
    per_row = 2 * (C * d_pad + cd_pad) * itemsize  # bytes per time row per step

    vmem_cap = _vmem_capacity_bytes()
    # Target big per-step HBM traffic (amortizes ~0.35 us/step overhead) while
    # keeping the double-buffered footprint comfortably inside every gen.
    budget = min(32 * 1024 * 1024, vmem_cap // 2)

    if t_tile is None:
        t_tile = _choose_t_tile(T, per_row, sub, budget)
    else:
        t_tile = T if t_tile >= T else max(sub, (t_tile // sub) * sub)
    n_t = pl.cdiv(T, t_tile)

    # v7x has 2 TensorCores per chip sharing HBM: make sure the all-parallel
    # grid has at least 2 steps so both cores get work.
    if N * n_t < 2 and T >= 2 * sub and t_tile >= 2 * sub:
        t_tile = pl.cdiv(pl.cdiv(T, 2), sub) * sub
        n_t = pl.cdiv(T, t_tile)

    step_bytes = per_row * t_tile
    vmem_limit = int(min(vmem_cap * 3 // 4,
                         max(16 * 1024 * 1024, step_bytes + (4 << 20))))

    grid = (N, n_t)
    in_specs = [pl.BlockSpec((1, C, t_tile, D),
                             lambda n, t: (n, 0, t, 0))]
    out_specs = pl.BlockSpec((1, t_tile, C * D),
                             lambda n, t: (n, t, 0))

    return pl.pallas_call(
        _merge_kernel,
        out_shape=out_shape,
        grid_spec=pltpu.PrefetchScalarGridSpec(
            num_scalar_prefetch=0,
            grid=grid,
            in_specs=in_specs,
            out_specs=out_specs,
        ),
        compiler_params=pltpu.CompilerParams(
            dimension_semantics=("parallel", "parallel"),
            vmem_limit_bytes=vmem_limit,
        ),
        cost_estimate=cost,
    )(x)


def _reference(x):
    N, C, T, D = x.shape
    return jnp.transpose(x, (0, 2, 1, 3)).reshape(N, T, C * D)


if __name__ == "__main__":
    key = jax.random.PRNGKey(0)

    # 1) Typical delta-feature shape (D = 32, C*D = 128): lane-merge stores.
    N, C, T, D = 2, 4, 16, 32  # output (2, 16, 128)
    x = jax.random.normal(key, (N, C, T, D), dtype=jnp.float32)
    out = jax.block_until_ready(unstack_delta(x))
    assert out.shape == (N, T, C * D)
    assert out.dtype == x.dtype
    assert jnp.array_equal(out, _reference(x))

    # 2) D multiple of 128: every per-channel store is a full-width vst.
    x2 = jax.random.normal(jax.random.PRNGKey(0), (2, 3, 16, 128),
                           dtype=jnp.float32)
    out2 = jax.block_until_ready(unstack_delta(x2))
    assert out2.shape == (2, 16, 3 * 128)
    assert jnp.array_equal(out2, _reference(x2))

    # 3) bf16 (sublane multiple 16), explicit tile, partial edge time tile.
    x3 = jax.random.normal(jax.random.PRNGKey(0), (1, 4, 40, 32),
                           dtype=jnp.bfloat16)
    out3 = jax.block_until_ready(unstack_delta(x3, t_tile=16))
    assert out3.shape == (1, 40, 128)
    assert out3.dtype == x3.dtype
    assert jnp.array_equal(out3, _reference(x3))

    # 4) Degenerate grid (N=1, one time tile): dual-TC halving path.
    x4 = jax.random.normal(jax.random.PRNGKey(0), (1, 4, 16, 32),
                           dtype=jnp.float32)
    out4 = jax.block_until_ready(unstack_delta(x4))
    assert out4.shape == (1, 16, 128)
    assert jnp.array_equal(out4, _reference(x4))

    print("KERNEL_OK")
</pallas_src>

<mosaic_0001>
module attributes {stable_mosaic.version = 11 : i64} {
  func.func @_merge_kernel(%arg0: i32, %arg1: i32, %arg2: memref<1x4x16x32xf32, #tpu.memory_space<vmem>>, %arg3: memref<1x16x128xf32, #tpu.memory_space<vmem>>) attributes {dimension_semantics = [#tpu.dimension_semantics<parallel>, #tpu.dimension_semantics<parallel>], iteration_bounds = array<i64: 2, 1>, scalar_prefetch = 0 : i64, scratch_operands = 0 : i64, tpu.core_type = #tpu.core_type<tc>, window_params = [{transform_indices = @transform_0, window_bounds = array<i64: 1, 4, 16, 32>}, {transform_indices = @transform_1, window_bounds = array<i64: 1, 16, 128>}]} {
    %c0 = arith.constant 0 : index
    %c0_0 = arith.constant 0 : index
    %c0_1 = arith.constant 0 : index
    %c0_2 = arith.constant 0 : index
    %0 = vector.load %arg2[%c0, %c0_0, %c0_1, %c0_2] : memref<1x4x16x32xf32, #tpu.memory_space<vmem>>, vector<1x1x16x32xf32>
    %1 = vector.shape_cast %0 : vector<1x1x16x32xf32> to vector<16x32xf32>
    %c0_3 = arith.constant 0 : index
    %c0_4 = arith.constant 0 : index
    %c0_5 = arith.constant 0 : index
    %2 = vector.load %arg3[%c0_3, %c0_4, %c0_5] : memref<1x16x128xf32, #tpu.memory_space<vmem>>, vector<1x16x32xf32>
    %3 = vector.shape_cast %2 : vector<1x16x32xf32> to vector<16x32xf32>
    %4 = vector.shape_cast %1 : vector<16x32xf32> to vector<1x16x32xf32>
    tpu.vector_store %arg3[%c0_3, %c0_4, %c0_5], %4 {strides = array<i32>} : memref<1x16x128xf32, #tpu.memory_space<vmem>>, vector<1x16x32xf32>,
    %c0_6 = arith.constant 0 : index
    %c1 = arith.constant 1 : index
    %c0_7 = arith.constant 0 : index
    %c0_8 = arith.constant 0 : index
    %5 = vector.load %arg2[%c0_6, %c1, %c0_7, %c0_8] : memref<1x4x16x32xf32, #tpu.memory_space<vmem>>, vector<1x1x16x32xf32>
    %6 = vector.shape_cast %5 : vector<1x1x16x32xf32> to vector<16x32xf32>
    %c0_9 = arith.constant 0 : index
    %c0_10 = arith.constant 0 : index
    %c32 = arith.constant 32 : index
    %7 = vector.load %arg3[%c0_9, %c0_10, %c32] : memref<1x16x128xf32, #tpu.memory_space<vmem>>, vector<1x16x32xf32>
    %8 = vector.shape_cast %7 : vector<1x16x32xf32> to vector<16x32xf32>
    %9 = vector.shape_cast %6 : vector<16x32xf32> to vector<1x16x32xf32>
    tpu.vector_store %arg3[%c0_9, %c0_10, %c32], %9 {strides = array<i32>} : memref<1x16x128xf32, #tpu.memory_space<vmem>>, vector<1x16x32xf32>,
    %c0_11 = arith.constant 0 : index
    %c2 = arith.constant 2 : index
    %c0_12 = arith.constant 0 : index
    %c0_13 = arith.constant 0 : index
    %10 = vector.load %arg2[%c0_11, %c2, %c0_12, %c0_13] : memref<1x4x16x32xf32, #tpu.memory_space<vmem>>, vector<1x1x16x32xf32>
    %11 = vector.shape_cast %10 : vector<1x1x16x32xf32> to vector<16x32xf32>
    %c0_14 = arith.constant 0 : index
    %c0_15 = arith.constant 0 : index
    %c64 = arith.constant 64 : index
    %12 = vector.load %arg3[%c0_14, %c0_15, %c64] : memref<1x16x128xf32, #tpu.memory_space<vmem>>, vector<1x16x32xf32>
    %13 = vector.shape_cast %12 : vector<1x16x32xf32> to vector<16x32xf32>
    %14 = vector.shape_cast %11 : vector<16x32xf32> to vector<1x16x32xf32>
    tpu.vector_store %arg3[%c0_14, %c0_15, %c64], %14 {strides = array<i32>} : memref<1x16x128xf32, #tpu.memory_space<vmem>>, vector<1x16x32xf32>,
    %c0_16 = arith.constant 0 : index
    %c3 = arith.constant 3 : index
    %c0_17 = arith.constant 0 : index
    %c0_18 = arith.constant 0 : index
    %15 = vector.load %arg2[%c0_16, %c3, %c0_17, %c0_18] : memref<1x4x16x32xf32, #tpu.memory_space<vmem>>, vector<1x1x16x32xf32>
    %16 = vector.shape_cast %15 : vector<1x1x16x32xf32> to vector<16x32xf32>
    %c0_19 = arith.constant 0 : index
    %c0_20 = arith.constant 0 : index
    %c96 = arith.constant 96 : index
    %17 = vector.load %arg3[%c0_19, %c0_20, %c96] : memref<1x16x128xf32, #tpu.memory_space<vmem>>, vector<1x16x32xf32>
    %18 = vector.shape_cast %17 : vector<1x16x32xf32> to vector<16x32xf32>
    %19 = vector.shape_cast %16 : vector<16x32xf32> to vector<1x16x32xf32>
    tpu.vector_store %arg3[%c0_19, %c0_20, %c96], %19 {strides = array<i32>} : memref<1x16x128xf32, #tpu.memory_space<vmem>>, vector<1x16x32xf32>,
    return
  }
  func.func @transform_0(%arg0: i32, %arg1: i32) -> (i32, i32, i32, i32) {
    %c0_i32 = arith.constant 0 : i32
    %c0_i32_0 = arith.constant 0 : i32
    %c0_i32_1 = arith.constant 0 : i32
    return %arg0, %c0_i32, %arg1, %c0_i32_0 : i32, i32, i32, i32
  }
  func.func @transform_1(%arg0: i32, %arg1: i32) -> (i32, i32, i32) {
    %c0_i32 = arith.constant 0 : i32
    %c0_i32_0 = arith.constant 0 : i32
    return %arg0, %arg1, %c0_i32 : i32, i32, i32
  }
}

</mosaic_0001>

<llo_original>
// kernel: tpu_custom_call.1
$region0: #{tpu_custom_call.1}
  #allocation0 [shape = 'u32[]', space=smem, size = 0x4, offset = 0x4, fixed_abs, tag = 'smem constant byte address 0x4 - core index']
  #allocation1 [shape = 'u32[72,128]{1,0:T(1,128)}', space=vmem, size = 0x9000, scoped, tag = 'internal scratch']
  %s0 = inlined_call_operand.hbm [shape: f32[2,4,16,32], index: 0, kind: input, shape index: {}]
  %s1 = inlined_call_operand.hbm [shape: f32[2,16,128], index: 1, kind: output, shape index: {}]
  %s2 = sld [smem:[#allocation0]]
  $region41: #{tpu_custom_call.1} parent=0
    _
  %s4 = ssub.s32 1, %s2
  %s5 = scalar_select 0, %s4, %s2
  $region1: #{tpu_custom_call.1} parent=0
    #allocation2 [shape = 'u8[65536]{0}', space=vmem, size = 0x10000, scoped, tag = 'input window, operand 0']
    #allocation3 [shape = 's32[2]{0}', space=sflag, size = 0x8, scoped, tag = 'scoped memory for tpu_custom_call.1']
    #allocation4 [shape = 's32[2]{0}', space=sflag, size = 0x8, scoped, tag = 'scoped memory for tpu_custom_call.1']
    #allocation5 [shape = 'u8[16384]{0}', space=vmem, size = 0x4000, scoped, tag = 'output window, operand 0']
    %6 = vsyncpa [#allocation3], 0
    %s7 = scalar_lea.sflag [#allocation3], 1
    %8 = vsyncpa %s7, 0
    %9 = vsyncpa [#allocation4], 0
    %s10 = scalar_lea.sflag [#allocation4], 1
    %11 = vsyncpa %s10, 0
    loop: start=0, step=1, limit=4
    $region2: #{tpu_custom_call.1} parent=1 // loop_pre_header
      _
    $region3: #{tpu_custom_call.1} parent=1 // loop_header
      %s13 = sphi 0, %s17
      %p14 = scmp.ge.s32.totalorder %s13, 4
      %s20 = sphi 0, %s32
      %s21 = sphi 0, %s28
      %s22 = sphi 0, %s20
      %s23 = sphi 0, %s21
      %s24 = sphi 0, %s22
      %s25 = sphi 0, %s23
      %s37 = sphi 0, %s39
      %s40 = sphi 0, %s37
      %s41 = sphi 0, %s40
      %s57 = sphi 0, %s41
      %s65 = sphi 0, %s67
      %s68 = sphi 0, %s65
      %s69 = sphi 0, %s68
      %s85 = sphi 0, %s69
    $region4: #{tpu_custom_call.1} parent=1 // loop_header_branch
      %16 = sbr.rel (%p14) target = $region8
    $region5: #{tpu_custom_call.1} parent=1 // loop_body
      %s18 = ssub.s32 %s13, 1
      %s19 = ssub.s32 %s13, 2
      %s26 = sadd.s32 1, %s21
      %p27 = scmp.ge.s32.totalorder %s26, 1
      %s28 = scalar_select %p27, 0, %s26
      %s29 = sadd.s32 1, %s20
      %s30 = scalar_select %p27, %s29, %s20
      %p31 = scmp.ge.s32.totalorder %s30, 2
      %s32 = scalar_select %p31, 0, %s30
      %s33 = ssub.s32 %s20, %s32
      %s34 = ssub.s32 %s21, %s28
      %s35 = sor.u32 %s33, %s34
      %p36 = scmp.eq.s32.totalorder %s35, 0
      %s38 = sadd.s32 %s37, 1
      %s39 = scalar_select %p36, %s37, %s38
      %p42 = pneg %p36
      %p43 = scmp.eq.s32.totalorder %s13, 1
      %p44 = por %p42, %p43
      %p45 = scmp.ne.s32.totalorder %s37, %s40
      %p46 = scmp.eq.s32.totalorder %s13, 0
      %p47 = por %p45, %p46
      %p48 = scmp.ne.s32.totalorder %s37, %s40
      %p49 = scmp.eq.s32.totalorder %s18, 1
      %p50 = por %p48, %p49
      %p51 = scmp.ne.s32.totalorder %s40, %s41
      %p52 = scmp.eq.s32.totalorder %s18, 0
      %p53 = por %p51, %p52
      %p54 = scmp.ne.s32.totalorder %s40, %s41
      %p55 = scmp.eq.s32.totalorder %s19, 1
      %p56 = por %p54, %p55
      %p58 = scmp.ne.s32.totalorder %s41, %s57
      %p59 = scmp.eq.s32.totalorder %s19, 0
      %p60 = por %p58, %p59
      %s61 = ssub.s32 %s20, %s32
      %s62 = ssub.s32 %s21, %s28
      %s63 = sor.u32 %s61, %s62
      %p64 = scmp.eq.s32.totalorder %s63, 0
      %s66 = sadd.s32 %s65, 1
      %s67 = scalar_select %p64, %s65, %s66
      %p70 = pneg %p64
      %p71 = scmp.eq.s32.totalorder %s13, 1
      %p72 = por %p70, %p71
      %p73 = scmp.ne.s32.totalorder %s65, %s68
      %p74 = scmp.eq.s32.totalorder %s13, 0
      %p75 = por %p73, %p74
      %p76 = scmp.ne.s32.totalorder %s65, %s68
      %p77 = scmp.eq.s32.totalorder %s18, 1
      %p78 = por %p76, %p77
      %p79 = scmp.ne.s32.totalorder %s68, %s69
      %p80 = scmp.eq.s32.totalorder %s18, 0
      %p81 = por %p79, %p80
      %p82 = scmp.ne.s32.totalorder %s68, %s69
      %p83 = scmp.eq.s32.totalorder %s19, 1
      %p84 = por %p82, %p83
      %p86 = scmp.ne.s32.totalorder %s69, %s85
      %p87 = scmp.eq.s32.totalorder %s19, 0
      %p88 = por %p86, %p87
      %p89 = scmp.le.s32.totalorder 1, %s13
      %p90 = scmp.lt.s32.totalorder %s13, 3
      %p91 = pnand %p89, %p90
      %p92 = pneg %p91
      // Predicated region
      $region9: #{tpu_custom_call.1} parent=5 // pred_check
        _
      $region10: #{tpu_custom_call.1} parent=5 // pred_check_branch
        %94 = sbr.rel (%p91) target = $region12
      $region11: #{tpu_custom_call.1} parent=5 // pred_region
        %s95 = ssub.s32 %s13, 1
      $region12: #{tpu_custom_call.1} parent=5 // pred_fallthru
        _
      %p96 = scmp.lt.s32.totalorder %s13, 2
      // Predicated region
      $region13: #{tpu_custom_call.1} parent=5 // pred_check
        %p97 = pneg %p96
      $region14: #{tpu_custom_call.1} parent=5 // pred_check_branch
        %99 = sbr.rel (%p97) target = $region16
      $region15: #{tpu_custom_call.1} parent=5 // pred_region
        // Predicated region
        $region17: #{tpu_custom_call.1} parent=15 // pred_check
          %p100 = pneg %p47
        $region18: #{tpu_custom_call.1} parent=15 // pred_check_branch
          %102 = sbr.rel (%p100) target = $region20
        $region19: #{tpu_custom_call.1} parent=15 // pred_region
          %s103 = sand.u32 %s37, 1
          %s104 = scalar_lea.sflag [#allocation3], %s103
          %s105 = sand.u32 %s37, 1
          %s106 = smul.addr %s105, 64
          %s107 = scalar_lea.vmem [#allocation2], %s106
          %s108 = smul.u32 2, %s21
          %110 = vsyncadd %s104, 0
          %s111 = smul.addr %s20, 8
          %s112 = sadd.s32 %s108, %s111
          %s113 = smul.addr %s112, 8
          %s114 = scalar_lea.hbm %s0, %s113
          %s115 = sshll.u32 %s114, 4
          %s116 = int_to_ptr.hbm [resolvable:$true] %s115
          %s117 = sshll.u32 %s107, 4
          %s118 = int_to_ptr.vmem [resolvable:$true] %s117
          %123 = dma.hbm_to_vmem [thread:$0]  %s116, 1024, %s118, %s104, 128, 128, 8
        $region20: #{tpu_custom_call.1} parent=15 // pred_fallthru
          _
      $region16: #{tpu_custom_call.1} parent=5 // pred_fallthru
        _
      %p124 = scmp.le.s32.totalorder 1, %s13
      %p125 = scmp.lt.s32.totalorder %s13, 3
      %p126 = pnand %p124, %p125
      %p127 = pneg %p126
      // Predicated region
      $region21: #{tpu_custom_call.1} parent=5 // pred_check
        _
      $region22: #{tpu_custom_call.1} parent=5 // pred_check_branch
        %129 = sbr.rel (%p126) target = $region24
      $region23: #{tpu_custom_call.1} parent=5 // pred_region
        %s130 = ssub.s32 %s13, 1
        %s131 = sand.u32 %s40, 1
        %s132 = scalar_lea.sflag [#allocation3], %s131
        %s133 = sand.u32 %s40, 1
        %s134 = smul.addr %s133, 64
        %s135 = scalar_lea.vmem [#allocation2], %s134
        // Predicated region
        $region25: #{tpu_custom_call.1} parent=23 // pred_check
          %p136 = pneg %p53
        $region26: #{tpu_custom_call.1} parent=23 // pred_check_branch
          %138 = sbr.rel (%p136) target = $region28
        $region27: #{tpu_custom_call.1} parent=23 // pred_region
          %140 = dma.done %s132, 1024
        $region28: #{tpu_custom_call.1} parent=23 // pred_fallthru
          _
        %s141 = sand.u32 %s40, 1
        %s142 = scalar_lea.sflag [#allocation3], %s141
        %s143 = sand.u32 %s40, 1
        %s144 = smul.addr %s143, 64
        %s145 = scalar_lea.vmem [#allocation2], %s144
        %p146 = pneg %p53
        %p147 = pneg %p50
        %p148 = pneg %p81
        %p149 = pneg %p78
        %s150 = sand.u32 %s68, 1
        %s151 = scalar_lea.sflag [#allocation4], %s150
        %s152 = sand.u32 %s68, 1
        %s153 = smul.addr %s152, 16
        %s154 = scalar_lea.vmem [#allocation5], %s153
        %s155 = smul.u32 2, %s23
        %s156 = smul.u32 2, %s23
        %v157 = vld [vmem:[%s135] sm:$0xff]
        %v158 = vld [vmem:[%s135 + $0x8] sm:$0xff]
        %vm159 = vcmask 261120
        %160 = vst.msk [vmem:[%s154] sm:$0xff] %vm159, %v157
        %161 = vst.msk [vmem:[%s154 + $0x8] sm:$0xff] %vm159, %v158
        %s162 = scalar_lea.vmem %s135, 16 [#allocation2]
        %v163 = vld [vmem:[%s162] sm:$0xff]
        %v164 = vld [vmem:[%s162 + $0x8] sm:$0xff]
        %167 = vrot.lane.b32.xlu0 %v163, 32
        %v168 = vpop.permute.xlu0 %167
        %169 = vrot.lane.b32.xlu0 %v164, 32
        %v170 = vpop.permute.xlu0 %169
        %vm173 = vcmask 523520
        %174 = vst.msk [vmem:[%s154] sm:$0xff] %vm173, %v168
        %175 = vst.msk [vmem:[%s154 + $0x8] sm:$0xff] %vm173, %v170
        %s176 = scalar_lea.vmem %s135, 32 [#allocation2]
        %v177 = vld [vmem:[%s176] sm:$0xff]
        %v178 = vld [vmem:[%s176 + $0x8] sm:$0xff]
        %181 = vrot.lane.b32.xlu0 %v177, 64
        %v182 = vpop.permute.xlu0 %181
        %183 = vrot.lane.b32.xlu0 %v178, 64
        %v184 = vpop.permute.xlu0 %183
        %vm187 = vcmask 785920
        %188 = vst.msk [vmem:[%s154] sm:$0xff] %vm187, %v182
        %189 = vst.msk [vmem:[%s154 + $0x8] sm:$0xff] %vm187, %v184
        %s190 = scalar_lea.vmem %s135, 48 [#allocation2]
        %v191 = vld [vmem:[%s190] sm:$0xff]
        %v192 = vld [vmem:[%s190 + $0x8] sm:$0xff]
        %195 = vrot.lane.b32.xlu0 %v191, 96
        %v196 = vpop.permute.xlu0 %195
        %197 = vrot.lane.b32.xlu0 %v192, 96
        %v198 = vpop.permute.xlu0 %197
        %vm201 = vcmask 1048320
        %202 = vst.msk [vmem:[%s154] sm:$0xff] %vm201, %v196
        %203 = vst.msk [vmem:[%s154 + $0x8] sm:$0xff] %vm201, %v198
        %s204 = sand.u32 %s68, 1
        %s205 = scalar_lea.sflag [#allocation4], %s204
        %s206 = sand.u32 %s68, 1
        %s207 = smul.addr %s206, 16
        %s208 = scalar_lea.vmem [#allocation5], %s207
        // Predicated region
        $region29: #{tpu_custom_call.1} parent=23 // pred_check
          %p209 = pneg %p78
        $region30: #{tpu_custom_call.1} parent=23 // pred_check_branch
          %211 = sbr.rel (%p209) target = $region32
        $region31: #{tpu_custom_call.1} parent=23 // pred_region
          %s212 = smul.u32 2, %s23
          %214 = vsyncadd %s205, 0
          %s215 = smul.addr %s22, 2
          %s216 = sadd.s32 %s212, %s215
          %s217 = smul.addr %s216, 8
          %s218 = scalar_lea.hbm %s1, %s217
          %s219 = sshll.u32 %s208, 4
          %s220 = int_to_ptr.vmem [resolvable:$true] %s219
          %s221 = sshll.u32 %s218, 4
          %s222 = int_to_ptr.hbm [resolvable:$true] %s221
          %227 = dma.vmem_to_hbm [thread:$0]  %s220, 256, %s222, %s205, 128, 128, 8
        $region32: #{tpu_custom_call.1} parent=23 // pred_fallthru
          _
      $region24: #{tpu_custom_call.1} parent=5 // pred_fallthru
        _
      %p228 = scmp.le.s32.totalorder 2, %s13
      // Predicated region
      $region33: #{tpu_custom_call.1} parent=5 // pred_check
        %p229 = pneg %p228
      $region34: #{tpu_custom_call.1} parent=5 // pred_check_branch
        %231 = sbr.rel (%p229) target = $region36
      $region35: #{tpu_custom_call.1} parent=5 // pred_region
        %s232 = ssub.s32 %s13, 2
        // Predicated region
        $region37: #{tpu_custom_call.1} parent=35 // pred_check
          %p233 = pneg %p84
        $region38: #{tpu_custom_call.1} parent=35 // pred_check_branch
          %235 = sbr.rel (%p233) target = $region40
        $region39: #{tpu_custom_call.1} parent=35 // pred_region
          %s236 = sand.u32 %s69, 1
          %s237 = scalar_lea.sflag [#allocation4], %s236
          %s238 = sand.u32 %s69, 1
          %s239 = smul.addr %s238, 16
          %s240 = scalar_lea.vmem [#allocation5], %s239
          %242 = dma.done %s237, 256
        $region40: #{tpu_custom_call.1} parent=35 // pred_fallthru
          _
      $region36: #{tpu_custom_call.1} parent=5 // pred_fallthru
        _
    $region6: #{tpu_custom_call.1} parent=1 // loop_footer
      %s17 = sadd.s32 1, %s13
    $region7: #{tpu_custom_call.1} parent=1 // loop_footer_branch
      %12 = sbr.rel target = $region3
    $region8: #{tpu_custom_call.1} parent=1 // loop_exit
      _
    %243 = vsyncpa [#allocation3], 1
    %s244 = scalar_lea.sflag [#allocation3], 1
    %245 = vsyncpa %s244, 1
    %246 = vsyncpa [#allocation4], 1
    %s247 = scalar_lea.sflag [#allocation4], 1
    %248 = vsyncpa %s247, 1

</llo_original>
